<compile_context>
chip_gen: v7x
topology: tpu7x:2x2x1
jax: 0.10.0
libtpu: 0.0.40
codegen_flags: <defaults>
</compile_context>

<pallas_src>
import functools

import jax
import jax.numpy as jnp
from jax.experimental import pallas as pl
from jax.experimental.pallas import tpu as pltpu

_LANE = 128


def _round_up(x, m):
    return ((x + m - 1) // m) * m


def _pad2d(x, rows, cols):
    return jnp.pad(x, ((0, rows - x.shape[0]), (0, cols - x.shape[1])))


@functools.lru_cache(maxsize=None)
def _vmem_limit_bytes():
    """Generation-aware scoped-VMEM limit (v5e/v6e: 128 MiB physical, v7x: 64 MiB)."""
    try:
        cap = int(pltpu.get_tpu_info().vmem_capacity_bytes)
    except Exception:
        cap = 64 * 1024 * 1024          # unknown -> assume the smallest (v7x per-core)
    return max(cap * 3 // 4, 32 * 1024 * 1024)


def _fused_vmem_bytes(n_pad, in_pad, hid_pad, out_pad):
    """Conservative VMEM estimate for the fused (A-resident) single-call kernel."""
    a_bytes = n_pad * n_pad * 2                               # bf16 A+I resident
    act_bytes = n_pad * (2 * in_pad + 4 * in_pad              # z_s, A@z (f32)
                         + 4 * hid_pad + 2 * hid_pad          # h (f32), h_s (bf16)
                         + 4 * hid_pad                        # A@h (f32)
                         + 2 * 4 * out_pad                    # y + output buffer
                         + 4)                                 # d column
    w_bytes = 2 * (in_pad * hid_pad + hid_pad * out_pad) + 4 * (hid_pad + out_pad)
    return a_bytes + act_bytes + w_bytes


def _pick_tile(num_nodes):
    """A-tile edge for the tiled path.  512 already reaches ~85% of the HBM
    roofline (measured) while keeping zero-padding waste small; VMEM use is
    bounded by the tile (K-tiling), not by the graph size."""
    n128 = max(_round_up(num_nodes, _LANE), _LANE)
    for t in (512, 256, 128):
        if n128 >= t:
            return t
    return _LANE


# ----------------------------------------------------------------------------
# Kernels
# ----------------------------------------------------------------------------
def gcn_layer_tiled_kernel(a_ref, x_ref, d_ref, w_ref, b_ref, o_ref, acc_ref,
                           *, apply_relu):
    """One GCN layer, (row, K)-tiled with an f32 accumulator.

      acc[i]  = sum_k (A+I)[i,k] @ (d ⊙ x)[k]        (K grid axis, f32 accumulate)
      out[i]  = relu?( (d[i] ⊙ acc[i]) @ W + b )      (at the last K step)
    """
    k = pl.program_id(1)

    @pl.when(k == 0)
    def _():
        acc_ref[...] = jnp.zeros_like(acc_ref)

    acc_ref[...] += jnp.dot(a_ref[...], x_ref[...],
                            preferred_element_type=jnp.float32)

    @pl.when(k == pl.num_programs(1) - 1)
    def _():
        agg = acc_ref[...] * d_ref[...]                    # finish D^{-1/2} row scale (f32)
        y = jnp.dot(agg.astype(w_ref.dtype), w_ref[...],
                    preferred_element_type=jnp.float32) + b_ref[...]
        if apply_relu:
            y = jnp.maximum(y, 0.0)
        o_ref[...] = y.astype(o_ref.dtype)


def fused_gcn_kernel(a_ref, z_ref, d_ref, w1_ref, b1_ref, w2_ref, b2_ref, o_ref):
    """Both GCN layers fused; (A+I) stays resident in VMEM (read from HBM once)."""
    a = a_ref[...]                                        # bf16 raw A+I
    d = d_ref[...]                                        # f32 [n, 1]
    az = d * jnp.dot(a, z_ref[...], preferred_element_type=jnp.float32)
    h = jnp.maximum(
        jnp.dot(az.astype(jnp.bfloat16), w1_ref[...],
                preferred_element_type=jnp.float32) + b1_ref[...], 0.0)
    h_s = (h * d).astype(jnp.bfloat16)                    # column pre-scale for layer 2
    ah = d * jnp.dot(a, h_s, preferred_element_type=jnp.float32)
    y = jnp.dot(ah.astype(jnp.bfloat16), w2_ref[...],
                preferred_element_type=jnp.float32) + b2_ref[...]
    o_ref[...] = y


def gcn_layer_tiled(a_p, x_p, d_p, w_p, b_p, *, apply_relu, out_dtype, tile,
                    vmem_limit):
    n_pad = a_p.shape[0]
    f_in = x_p.shape[1]
    f_out = w_p.shape[1]
    tm = tk = tile
    kernel = functools.partial(gcn_layer_tiled_kernel, apply_relu=apply_relu)
    return pl.pallas_call(
        kernel,
        out_shape=jax.ShapeDtypeStruct((n_pad, f_out), out_dtype),
        grid=(n_pad // tm, n_pad // tk),
        in_specs=[
            pl.BlockSpec((tm, tk), lambda i, k: (i, k)),       # streamed A+I tile
            pl.BlockSpec((tk, f_in), lambda i, k: (k, 0)),     # pre-scaled x K-block
            pl.BlockSpec((tm, 1), lambda i, k: (i, 0)),        # D^{-1/2} row block
            pl.BlockSpec((f_in, f_out), lambda i, k: (0, 0)),  # W (grid-invariant, tiny)
            pl.BlockSpec((1, f_out), lambda i, k: (0, 0)),     # b (grid-invariant, tiny)
        ],
        out_specs=pl.BlockSpec((tm, f_out), lambda i, k: (i, 0)),
        scratch_shapes=[pltpu.VMEM((tm, f_in), jnp.float32)],  # f32 accumulator
        compiler_params=pltpu.CompilerParams(
            dimension_semantics=("parallel", "arbitrary"),
            vmem_limit_bytes=vmem_limit,
        ),
    )(a_p, x_p, d_p, w_p, b_p)


# ----------------------------------------------------------------------------
# Glue (plain JAX): sparse edge list -> dense A+I and D^{-1/2}
# ----------------------------------------------------------------------------
def build_adj(edge_index, num_nodes):
    """Dense unnormalized A+I and D^{-1/2} from edge_index [2, E] (src -> dst)."""
    src = edge_index[0]
    dst = edge_index[1]
    a = jnp.zeros((num_nodes, num_nodes), jnp.float32)
    a = a.at[dst, src].add(1.0)                       # messages flow src -> dst
    a = a + jnp.eye(num_nodes, dtype=jnp.float32)     # self-loops
    deg = a.sum(axis=1)
    d_inv_sqrt = jnp.where(deg > 0.0, 1.0 / jnp.sqrt(deg), 0.0)
    return a, d_inv_sqrt


@functools.partial(jax.jit, static_argnames=("num_nodes", "out_dim", "force_tiled"))
def attribute_decoder_forward(z, edge_index, w1, b1, w2, b2, *,
                              num_nodes, out_dim, force_tiled=False):
    a_raw, d = build_adj(edge_index, num_nodes)

    in_dim = z.shape[1]
    hid = w1.shape[1]
    in_pad = max(_round_up(in_dim, _LANE), _LANE)
    hid_pad = max(_round_up(hid, _LANE), _LANE)
    out_pad = max(_round_up(out_dim, _LANE), _LANE)
    vmem_limit = _vmem_limit_bytes()

    n128 = max(_round_up(num_nodes, _LANE), _LANE)
    use_fused = (not force_tiled and
                 _fused_vmem_bytes(n128, in_pad, hid_pad, out_pad) + (4 << 20)
                 <= vmem_limit)

    if use_fused:
        n_pad = n128
        tile = None
    else:
        tile = _pick_tile(num_nodes)
        n_pad = max(_round_up(num_nodes, tile), tile)

    # Zero-padding is a numeric no-op for the real outputs: padded A rows/cols
    # and padded d entries are zero, and the final slice drops padded rows.
    # (A+I) entries are small integers -> exact in bf16.
    a_p = _pad2d(a_raw, n_pad, n_pad).astype(jnp.bfloat16)
    d_p = _pad2d(d[:, None], n_pad, 1)                               # f32 [n_pad, 1]
    z_s = _pad2d(z * d[:, None], n_pad, in_pad).astype(jnp.bfloat16)  # column pre-scale
    w1_p = _pad2d(w1, in_pad, hid_pad).astype(jnp.bfloat16)
    b1_p = _pad2d(b1, 1, hid_pad)                                    # f32, post-accum
    w2_p = _pad2d(w2, hid_pad, out_pad).astype(jnp.bfloat16)
    b2_p = _pad2d(b2, 1, out_pad)                                    # f32

    if use_fused:
        # Both layers in one call; A is read from HBM exactly once.
        y = pl.pallas_call(
            fused_gcn_kernel,
            out_shape=jax.ShapeDtypeStruct((n_pad, out_pad), jnp.float32),
            compiler_params=pltpu.CompilerParams(vmem_limit_bytes=vmem_limit),
        )(a_p, z_s, d_p, w1_p, b1_p, w2_p, b2_p)
    else:
        # Layer 1: h = relu( d ⊙ ((A+I) @ (d ⊙ z)) @ W1 + b1 )   (kept bf16)
        h = gcn_layer_tiled(a_p, z_s, d_p, w1_p, b1_p, apply_relu=True,
                            out_dtype=jnp.bfloat16, tile=tile, vmem_limit=vmem_limit)
        # Column pre-scale for layer 2 (cheap N x 128 pass; all N^2 work stays in-kernel).
        h_s = (h.astype(jnp.float32) * d_p).astype(jnp.bfloat16)
        # Layer 2: y = d ⊙ ((A+I) @ (d ⊙ h)) @ W2 + b2
        y = gcn_layer_tiled(a_p, h_s, d_p, w2_p, b2_p, apply_relu=False,
                            out_dtype=jnp.float32, tile=tile, vmem_limit=vmem_limit)

    return y[:num_nodes, :out_dim]


def glorot(key, shape):
    fan_in, fan_out = shape
    limit = jnp.sqrt(6.0 / (fan_in + fan_out))
    return jax.random.uniform(key, shape, jnp.float32, -limit, limit)


if __name__ == "__main__":
    IN_Z = 64      # GCNConv-1 input dim (spec: 64)
    HID = 128      # hidden dim (spec: 128)
    OUT_DIM = 32   # reconstructed attribute dim

    key = jax.random.PRNGKey(0)
    k_w1, k_w2, k_b1, k_b2, k_g1, k_g2 = jax.random.split(key, 6)

    # GCNConv-style glorot weights; small nonzero biases to exercise the bias path.
    w1 = glorot(k_w1, (IN_Z, HID))
    b1 = 0.05 * jax.random.normal(k_b1, (1, HID), jnp.float32)
    w2 = glorot(k_w2, (HID, OUT_DIM))
    b2 = 0.05 * jax.random.normal(k_b2, (1, OUT_DIM), jnp.float32)

    def make_graph(k, n, e):
        kz, ks, kd = jax.random.split(k, 3)
        z = jax.random.normal(kz, (n, IN_Z), jnp.float32)
        src = jax.random.randint(ks, (e,), 0, n)
        dst = jax.random.randint(kd, (e,), 0, n)
        dst = jnp.where(dst == src, (dst + 1) % n, dst)   # no pre-existing self-loops
        return z, jnp.stack([src, dst], axis=0)           # [2, E]

    def ref_f32(z, edge_index, n):
        a_raw, d = build_adj(edge_index, n)
        a_hat = d[:, None] * a_raw * d[None, :]
        hp = jax.lax.Precision.HIGHEST
        h = jnp.maximum(
            jnp.dot(a_hat, jnp.dot(z, w1, precision=hp), precision=hp) + b1, 0.0)
        return jnp.dot(a_hat, jnp.dot(h, w2, precision=hp), precision=hp) + b2

    def ref_kernel_math(z, edge_index, n):
        # Mirrors the kernel's bf16-input / f32-accumulate math (incl. folded norm).
        a_raw, d = build_adj(edge_index, n)
        a_bf = a_raw.astype(jnp.bfloat16)
        dc = d[:, None]
        z_s = (z * dc).astype(jnp.bfloat16)
        az = dc * jnp.dot(a_bf, z_s, preferred_element_type=jnp.float32)
        h = jnp.maximum(
            jnp.dot(az.astype(jnp.bfloat16), w1.astype(jnp.bfloat16),
                    preferred_element_type=jnp.float32) + b1, 0.0)
        h_s = (h * dc).astype(jnp.bfloat16)
        ah = dc * jnp.dot(a_bf, h_s, preferred_element_type=jnp.float32)
        return jnp.dot(ah.astype(jnp.bfloat16), w2.astype(jnp.bfloat16),
                       preferred_element_type=jnp.float32) + b2

    # TODO(synk): for workloads with many tiny graphs (N~8), batch block-diagonal
    # A_hat (or a leading batch grid axis) instead of one pallas_call per graph.
    cases = [
        # (name, num_nodes, num_edges, force_tiled, graph_key)
        ("fused  (A resident, read once)", 8, 16, False, k_g1),
        ("tiled  (row x K grid + f32 acc)", 300, 900, True, k_g2),
    ]
    for name, n, e, force_tiled, gk in cases:
        z, edge_index = make_graph(gk, n, e)
        x_hat = attribute_decoder_forward(
            z, edge_index, w1, b1, w2, b2,
            num_nodes=n, out_dim=OUT_DIM, force_tiled=force_tiled)
        x_hat = jax.block_until_ready(x_hat)
        assert x_hat.shape == (n, OUT_DIM), (name, x_hat.shape)

        r_bf = ref_kernel_math(z, edge_index, n)
        assert jnp.allclose(x_hat, r_bf, atol=2e-2, rtol=2e-2), \
            (name, float(jnp.max(jnp.abs(x_hat - r_bf))))

        r_f32 = ref_f32(z, edge_index, n)
        assert jnp.allclose(x_hat, r_f32, atol=6e-2, rtol=6e-2), \
            (name, float(jnp.max(jnp.abs(x_hat - r_f32))))

    print("KERNEL_OK")
</pallas_src>

<mosaic_0001>
module attributes {stable_mosaic.version = 11 : i64} {
  func.func private @main(%arg0: i32) attributes {dimension_semantics = [#tpu.dimension_semantics<core_parallel>], iteration_bounds = array<i64: 2>, tpu.core_type = #tpu.core_type<sc_scalar_subcore>, window_params = []} {
    return
  }
}

module attributes {stable_mosaic.version = 11 : i64} {
  func.func private @main(%arg0: i32) attributes {dimension_semantics = [#tpu.dimension_semantics<core_parallel>], iteration_bounds = array<i64: 2>, tpu.core_type = #tpu.core_type<sc_scalar_subcore>, window_params = []} {
    return
  }
}

module attributes {stable_mosaic.version = 11 : i64} {
  func.func @fused_gcn_kernel(%arg0: memref<128x128xbf16, #tpu.memory_space<vmem>>, %arg1: memref<128x128xbf16, #tpu.memory_space<vmem>>, %arg2: memref<128x1xf32, #tpu.memory_space<vmem>>, %arg3: memref<128x128xbf16, #tpu.memory_space<vmem>>, %arg4: memref<1x128xf32, #tpu.memory_space<vmem>>, %arg5: memref<128x128xbf16, #tpu.memory_space<vmem>>, %arg6: memref<1x128xf32, #tpu.memory_space<vmem>>, %arg7: memref<128x128xf32, #tpu.memory_space<vmem>>) attributes {dimension_semantics = [], scalar_prefetch = 0 : i64, scratch_operands = 0 : i64, tpu.core_type = #tpu.core_type<tc>} {
    %c0 = arith.constant 0 : index
    %c0_0 = arith.constant 0 : index
    %0 = vector.load %arg0[%c0, %c0_0] : memref<128x128xbf16, #tpu.memory_space<vmem>>, vector<128x128xbf16>
    %c0_1 = arith.constant 0 : index
    %c0_2 = arith.constant 0 : index
    %1 = vector.load %arg2[%c0_1, %c0_2] : memref<128x1xf32, #tpu.memory_space<vmem>>, vector<128x1xf32>
    %c0_3 = arith.constant 0 : index
    %c0_4 = arith.constant 0 : index
    %2 = vector.load %arg1[%c0_3, %c0_4] : memref<128x128xbf16, #tpu.memory_space<vmem>>, vector<128x128xbf16>
    %cst = arith.constant dense<0.000000e+00> : vector<128x128xf32>
    %3 = tpu.matmul %0, %2, %cst {dimension_numbers = #tpu.dot_dimension_numbers<[1], [0], [0], [1], [0, 0, 1, 1], [], []>} : vector<128x128xbf16>, vector<128x128xbf16>, vector<128x128xf32> -> vector<128x128xf32>
    %4 = vector.broadcast %1 : vector<128x1xf32> to vector<128x128xf32>
    %5 = arith.mulf %4, %3 : vector<128x128xf32>
    %6 = arith.truncf %5 : vector<128x128xf32> to vector<128x128xbf16>
    %c0_5 = arith.constant 0 : index
    %c0_6 = arith.constant 0 : index
    %7 = vector.load %arg3[%c0_5, %c0_6] : memref<128x128xbf16, #tpu.memory_space<vmem>>, vector<128x128xbf16>
    %cst_7 = arith.constant dense<0.000000e+00> : vector<128x128xf32>
    %8 = tpu.matmul %6, %7, %cst_7 {dimension_numbers = #tpu.dot_dimension_numbers<[1], [0], [0], [1], [0, 0, 1, 1], [], []>} : vector<128x128xbf16>, vector<128x128xbf16>, vector<128x128xf32> -> vector<128x128xf32>
    %c0_8 = arith.constant 0 : index
    %c0_9 = arith.constant 0 : index
    %9 = vector.load %arg4[%c0_8, %c0_9] : memref<1x128xf32, #tpu.memory_space<vmem>>, vector<1x128xf32>
    %10 = vector.broadcast %9 : vector<1x128xf32> to vector<128x128xf32>
    %11 = arith.addf %8, %10 : vector<128x128xf32>
    %cst_10 = arith.constant 0.000000e+00 : f32
    %12 = vector.broadcast %cst_10 : f32 to vector<128x128xf32>
    %13 = arith.maximumf %11, %12 : vector<128x128xf32>
    %14 = vector.broadcast %1 : vector<128x1xf32> to vector<128x128xf32>
    %15 = arith.mulf %13, %14 : vector<128x128xf32>
    %16 = arith.truncf %15 : vector<128x128xf32> to vector<128x128xbf16>
    %cst_11 = arith.constant dense<0.000000e+00> : vector<128x128xf32>
    %17 = tpu.matmul %0, %16, %cst_11 {dimension_numbers = #tpu.dot_dimension_numbers<[1], [0], [0], [1], [0, 0, 1, 1], [], []>} : vector<128x128xbf16>, vector<128x128xbf16>, vector<128x128xf32> -> vector<128x128xf32>
    %18 = vector.broadcast %1 : vector<128x1xf32> to vector<128x128xf32>
    %19 = arith.mulf %18, %17 : vector<128x128xf32>
    %20 = arith.truncf %19 : vector<128x128xf32> to vector<128x128xbf16>
    %c0_12 = arith.constant 0 : index
    %c0_13 = arith.constant 0 : index
    %21 = vector.load %arg5[%c0_12, %c0_13] : memref<128x128xbf16, #tpu.memory_space<vmem>>, vector<128x128xbf16>
    %cst_14 = arith.constant dense<0.000000e+00> : vector<128x128xf32>
    %22 = tpu.matmul %20, %21, %cst_14 {dimension_numbers = #tpu.dot_dimension_numbers<[1], [0], [0], [1], [0, 0, 1, 1], [], []>} : vector<128x128xbf16>, vector<128x128xbf16>, vector<128x128xf32> -> vector<128x128xf32>
    %c0_15 = arith.constant 0 : index
    %c0_16 = arith.constant 0 : index
    %23 = vector.load %arg6[%c0_15, %c0_16] : memref<1x128xf32, #tpu.memory_space<vmem>>, vector<1x128xf32>
    %24 = vector.broadcast %23 : vector<1x128xf32> to vector<128x128xf32>
    %25 = arith.addf %22, %24 : vector<128x128xf32>
    %c0_17 = arith.constant 0 : index
    %c0_18 = arith.constant 0 : index
    %26 = vector.load %arg7[%c0_17, %c0_18] : memref<128x128xf32, #tpu.memory_space<vmem>>, vector<128x128xf32>
    tpu.vector_store %arg7[%c0_17, %c0_18], %25 {strides = array<i32>} : memref<128x128xf32, #tpu.memory_space<vmem>>, vector<128x128xf32>,
    return
  }
}

</mosaic_0001>

<llo_original>
// kernel: attribute_decoder_forward.1
$region0: #{attribute_decoder_forward.1}
  #allocation0 [shape = 'u32[]', space=smem, size = 0x4, offset = 0x4, fixed_abs, tag = 'smem constant byte address 0x4 - core index']
  #allocation1 [shape = 'u32[144,128]{1,0:T(1,128)}', space=vmem, size = 0x12000, scoped, tag = 'internal scratch']
  %s0 = inlined_call_operand.vmem [shape: bf16[128,128], index: 0, kind: input, shape index: {}]
  %s1 = inlined_call_operand.vmem [shape: bf16[128,128], index: 1, kind: input, shape index: {}]
  %s2 = inlined_call_operand.vmem [shape: f32[128,1], index: 2, kind: input, shape index: {}]
  %s3 = inlined_call_operand.vmem [shape: bf16[128,128], index: 3, kind: input, shape index: {}]
  %s4 = inlined_call_operand.vmem [shape: f32[1,128], index: 4, kind: input, shape index: {}]
  %s5 = inlined_call_operand.vmem [shape: bf16[128,128], index: 5, kind: input, shape index: {}]
  %s6 = inlined_call_operand.vmem [shape: f32[1,128], index: 6, kind: input, shape index: {}]
  %s7 = inlined_call_operand.vmem [shape: f32[128,128], index: 7, kind: output, shape index: {}]
  %s8 = sld [smem:[#allocation0]]
  $region38: #{attribute_decoder_forward.1} parent=0
    _
  %s10 = ssub.s32 1, %s8
  %s11 = scalar_select 0, %s10, %s8
  // Predicated region
  $region2: #{attribute_decoder_forward.1} parent=0 // pred_check
    _
  $region3: #{attribute_decoder_forward.1} parent=0 // pred_check_branch
    %13 = sbr.rel (0) target = $region5
  $region4: #{attribute_decoder_forward.1} parent=0 // pred_region
    _
  $region5: #{attribute_decoder_forward.1} parent=0 // pred_fallthru
    _
  // Predicated region
  $region6: #{attribute_decoder_forward.1} parent=0 // pred_check
    _
  $region7: #{attribute_decoder_forward.1} parent=0 // pred_check_branch
    %15 = sbr.rel (0) target = $region9
  $region8: #{attribute_decoder_forward.1} parent=0 // pred_region
    _
  $region9: #{attribute_decoder_forward.1} parent=0 // pred_fallthru
    _
  // Predicated region
  $region10: #{attribute_decoder_forward.1} parent=0 // pred_check
    _
  $region11: #{attribute_decoder_forward.1} parent=0 // pred_check_branch
    %17 = sbr.rel (0) target = $region13
  $region12: #{attribute_decoder_forward.1} parent=0 // pred_region
    _
  $region13: #{attribute_decoder_forward.1} parent=0 // pred_fallthru
    _
  // Predicated region
  $region14: #{attribute_decoder_forward.1} parent=0 // pred_check
    _
  $region15: #{attribute_decoder_forward.1} parent=0 // pred_check_branch
    %19 = sbr.rel (0) target = $region17
  $region16: #{attribute_decoder_forward.1} parent=0 // pred_region
    _
  $region17: #{attribute_decoder_forward.1} parent=0 // pred_fallthru
    _
  // Predicated region
  $region18: #{attribute_decoder_forward.1} parent=0 // pred_check
    _
  $region19: #{attribute_decoder_forward.1} parent=0 // pred_check_branch
    %21 = sbr.rel (0) target = $region21
  $region20: #{attribute_decoder_forward.1} parent=0 // pred_region
    _
  $region21: #{attribute_decoder_forward.1} parent=0 // pred_fallthru
    _
  // Predicated region
  $region22: #{attribute_decoder_forward.1} parent=0 // pred_check
    _
  $region23: #{attribute_decoder_forward.1} parent=0 // pred_check_branch
    %23 = sbr.rel (0) target = $region25
  $region24: #{attribute_decoder_forward.1} parent=0 // pred_region
    _
  $region25: #{attribute_decoder_forward.1} parent=0 // pred_fallthru
    _
  // Predicated region
  $region26: #{attribute_decoder_forward.1} parent=0 // pred_check
    _
  $region27: #{attribute_decoder_forward.1} parent=0 // pred_check_branch
    %25 = sbr.rel (0) target = $region29
  $region28: #{attribute_decoder_forward.1} parent=0 // pred_region
    _
  $region29: #{attribute_decoder_forward.1} parent=0 // pred_fallthru
    _
  %v27 = vld [vmem:[%s0] sm:$0xf]
  %v28 = vld [vmem:[%s0 + $0x4] sm:$0xf]
  %v29 = vld [vmem:[%s0 + $0x8] sm:$0xf]
  %v30 = vld [vmem:[%s0 + $0xc] sm:$0xf]
  %v31 = vld [vmem:[%s0 + $0x10] sm:$0xf]
  %v32 = vld [vmem:[%s0 + $0x14] sm:$0xf]
  %v33 = vld [vmem:[%s0 + $0x18] sm:$0xf]
  %v34 = vld [vmem:[%s0 + $0x1c] sm:$0xf]
  %v35 = vld [vmem:[%s0 + $0x20] sm:$0xf]
  %v36 = vld [vmem:[%s0 + $0x24] sm:$0xf]
  %v37 = vld [vmem:[%s0 + $0x28] sm:$0xf]
  %v38 = vld [vmem:[%s0 + $0x2c] sm:$0xf]
  %v39 = vld [vmem:[%s0 + $0x30] sm:$0xf]
  %v40 = vld [vmem:[%s0 + $0x34] sm:$0xf]
  %v41 = vld [vmem:[%s0 + $0x38] sm:$0xf]
  %v42 = vld [vmem:[%s0 + $0x3c] sm:$0xf]
  %v43 = vld [vmem:[%s2] sm:$0xff]
  %v44 = vld [vmem:[%s2 + $0x8] sm:$0xff]
  %v45 = vld [vmem:[%s2 + $0x10] sm:$0xff]
  %v46 = vld [vmem:[%s2 + $0x18] sm:$0xff]
  %v47 = vld [vmem:[%s2 + $0x20] sm:$0xff]
  %v48 = vld [vmem:[%s2 + $0x28] sm:$0xff]
  %v49 = vld [vmem:[%s2 + $0x30] sm:$0xff]
  %v50 = vld [vmem:[%s2 + $0x38] sm:$0xff]
  %v51 = vld [vmem:[%s2 + $0x40] sm:$0xff]
  %v52 = vld [vmem:[%s2 + $0x48] sm:$0xff]
  %v53 = vld [vmem:[%s2 + $0x50] sm:$0xff]
  %v54 = vld [vmem:[%s2 + $0x58] sm:$0xff]
  %v55 = vld [vmem:[%s2 + $0x60] sm:$0xff]
  %v56 = vld [vmem:[%s2 + $0x68] sm:$0xff]
  %v57 = vld [vmem:[%s2 + $0x70] sm:$0xff]
  %v58 = vld [vmem:[%s2 + $0x78] sm:$0xff]
  %v59 = vld [vmem:[%s1] sm:$0xf]
  %v60 = vld [vmem:[%s1 + $0x4] sm:$0xf]
  %v61 = vld [vmem:[%s1 + $0x8] sm:$0xf]
  %v62 = vld [vmem:[%s1 + $0xc] sm:$0xf]
  %v63 = vld [vmem:[%s1 + $0x10] sm:$0xf]
  %v64 = vld [vmem:[%s1 + $0x14] sm:$0xf]
  %v65 = vld [vmem:[%s1 + $0x18] sm:$0xf]
  %v66 = vld [vmem:[%s1 + $0x1c] sm:$0xf]
  %v67 = vld [vmem:[%s1 + $0x20] sm:$0xf]
  %v68 = vld [vmem:[%s1 + $0x24] sm:$0xf]
  %v69 = vld [vmem:[%s1 + $0x28] sm:$0xf]
  %v70 = vld [vmem:[%s1 + $0x2c] sm:$0xf]
  %v71 = vld [vmem:[%s1 + $0x30] sm:$0xf]
  %v72 = vld [vmem:[%s1 + $0x34] sm:$0xf]
  %v73 = vld [vmem:[%s1 + $0x38] sm:$0xf]
  %v74 = vld [vmem:[%s1 + $0x3c] sm:$0xf]
  %v91 = vunpack.c.l.b16 %v27
  %v92 = vunpack.c.l.b16 %v28
  %v93 = vunpack.c.l.b16 %v29
  %v94 = vunpack.c.l.b16 %v30
  %v95 = vunpack.c.l.b16 %v31
  %v96 = vunpack.c.l.b16 %v32
  %v97 = vunpack.c.l.b16 %v33
  %v98 = vunpack.c.l.b16 %v34
  %v99 = vunpack.c.l.b16 %v35
  %v100 = vunpack.c.l.b16 %v36
  %v101 = vunpack.c.l.b16 %v37
  %v102 = vunpack.c.l.b16 %v38
  %v103 = vunpack.c.l.b16 %v39
  %v104 = vunpack.c.l.b16 %v40
  %v105 = vunpack.c.l.b16 %v41
  %v106 = vunpack.c.l.b16 %v42
  %v107 = vpack.c.b16 %v92, %v91
  %v108 = vpack.c.b16 %v94, %v93
  %v109 = vpack.c.b16 %v96, %v95
  %v110 = vpack.c.b16 %v98, %v97
  %v111 = vpack.c.b16 %v100, %v99
  %v112 = vpack.c.b16 %v102, %v101
  %v113 = vpack.c.b16 %v104, %v103
  %v114 = vpack.c.b16 %v106, %v105
  %v139 = vunpack.c.l.b16 %v59
  %v140 = vunpack.c.l.b16 %v60
  %v141 = vunpack.c.l.b16 %v61
  %v142 = vunpack.c.l.b16 %v62
  %v143 = vunpack.c.l.b16 %v63
  %v144 = vunpack.c.l.b16 %v64
  %v145 = vunpack.c.l.b16 %v65
  %v146 = vunpack.c.l.b16 %v66
  %v147 = vunpack.c.l.b16 %v67
  %v148 = vunpack.c.l.b16 %v68
  %v149 = vunpack.c.l.b16 %v69
  %v150 = vunpack.c.l.b16 %v70
  %v151 = vunpack.c.l.b16 %v71
  %v152 = vunpack.c.l.b16 %v72
  %v153 = vunpack.c.l.b16 %v73
  %v154 = vunpack.c.l.b16 %v74
  %v155 = vpack.c.b16 %v140, %v139
  %v156 = vpack.c.b16 %v142, %v141
  %v157 = vpack.c.b16 %v144, %v143
  %v158 = vpack.c.b16 %v146, %v145
  %v159 = vpack.c.b16 %v148, %v147
  %v160 = vpack.c.b16 %v150, %v149
  %v161 = vpack.c.b16 %v152, %v151
  %v162 = vpack.c.b16 %v154, %v153
  %171 = vmatprep.subr.bf16.mxu0 0
  %172 = vmatpush1.bf16.msra.mxu0 %v155
  %173 = vmatprep.subr.bf16.mxu0 0
  %174 = vmatpush1.bf16.msra.mxu0 %v156
  %175 = vmatprep.subr.bf16.mxu0 0
  %176 = vmatpush1.bf16.msra.mxu0 %v157
  %177 = vmatprep.subr.bf16.mxu0 0
  %178 = vmatpush1.bf16.msra.mxu0 %v158
  %179 = vmatprep.subr.bf16.mxu0 0
  %180 = vmatpush1.bf16.msra.mxu0 %v159
  %181 = vmatprep.subr.bf16.mxu0 0
  %182 = vmatpush1.bf16.msra.mxu0 %v160
  %183 = vmatprep.subr.bf16.mxu0 0
  %184 = vmatpush1.bf16.msra.mxu0 %v161
  %185 = vmatprep.subr.bf16.mxu0 0
  %186 = vmatpush1.bf16.msra.mxu0 %v162
  %187 = vmatprep.subr.bf16.mxu0 0
  %188 = vmatpush1.bf16.msra.mxu0 0
  %189 = vmatprep.subr.bf16.mxu0 0
  %190 = vmatpush1.bf16.msra.mxu0 0
  %191 = vmatprep.subr.bf16.mxu0 0
  %192 = vmatpush1.bf16.msra.mxu0 0
  %193 = vmatprep.subr.bf16.mxu0 0
  %194 = vmatpush1.bf16.msra.mxu0 0
  %195 = vmatprep.subr.bf16.mxu0 0
  %196 = vmatpush1.bf16.msra.mxu0 0
  %197 = vmatprep.subr.bf16.mxu0 0
  %198 = vmatpush1.bf16.msra.mxu0 0
  %199 = vmatprep.subr.bf16.mxu0 0
  %200 = vmatpush1.bf16.msra.mxu0 0
  %201 = vmatprep.subr.bf16.mxu0 0
  %202 = vmatpush1.bf16.msra.mxu0 0
  %203 = vmatprep.mubr.bf16.mxu0 0
  %204 = vmatmul.mubr.bf16.gmra.mrb[0].mxu0 %v107
  %v205 = vpop.f32.mrb[0].mxu0
  %v206 = vadd.f32 0.0, %v205
  %v207 = vpop.f32.mrb[0].mxu0
  %v208 = vpop.f32.mrb[0].mxu0
  %v209 = vadd.f32 0.0, %v208
  %v210 = vpop.f32.mrb[0].mxu0
  %211 = vmatprep.mubr.bf16.mxu0 0
  %212 = vmatmul.mubr.bf16.gmra.mrb[0].mxu0 %v108
  %v213 = vpop.f32.mrb[0].mxu0
  %v214 = vadd.f32 0.0, %v213
  %v215 = vpop.f32.mrb[0].mxu0
  %v216 = vpop.f32.mrb[0].mxu0
  %v217 = vadd.f32 0.0, %v216
  %v218 = vpop.f32.mrb[0].mxu0
  %219 = vmatprep.mubr.bf16.mxu0 0
  %220 = vmatmul.mubr.bf16.gmra.mrb[0].mxu0 %v109
  %v221 = vpop.f32.mrb[0].mxu0
  %v222 = vadd.f32 0.0, %v221
  %v223 = vpop.f32.mrb[0].mxu0
  %v224 = vpop.f32.mrb[0].mxu0
  %v225 = vadd.f32 0.0, %v224
  %v226 = vpop.f32.mrb[0].mxu0
  %227 = vmatprep.mubr.bf16.mxu0 0
  %228 = vmatmul.mubr.bf16.gmra.mrb[0].mxu0 %v110
  %v229 = vpop.f32.mrb[0].mxu0
  %v230 = vadd.f32 0.0, %v229
  %v231 = vpop.f32.mrb[0].mxu0
  %v232 = vpop.f32.mrb[0].mxu0
  %v233 = vadd.f32 0.0, %v232
  %v234 = vpop.f32.mrb[0].mxu0
  %235 = vmatprep.mubr.bf16.mxu0 0
  %236 = vmatmul.mubr.bf16.gmra.mrb[0].mxu0 %v111
  %v237 = vpop.f32.mrb[0].mxu0
  %v238 = vadd.f32 0.0, %v237
  %v239 = vpop.f32.mrb[0].mxu0
  %v240 = vpop.f32.mrb[0].mxu0
  %v241 = vadd.f32 0.0, %v240
  %v242 = vpop.f32.mrb[0].mxu0
  %243 = vmatprep.mubr.bf16.mxu0 0
  %244 = vmatmul.mubr.bf16.gmra.mrb[0].mxu0 %v112
  %v245 = vpop.f32.mrb[0].mxu0
  %v246 = vadd.f32 0.0, %v245
  %v247 = vpop.f32.mrb[0].mxu0
  %v248 = vpop.f32.mrb[0].mxu0
  %v249 = vadd.f32 0.0, %v248
  %v250 = vpop.f32.mrb[0].mxu0
  %251 = vmatprep.mubr.bf16.mxu0 0
  %252 = vmatmul.mubr.bf16.gmra.mrb[0].mxu0 %v113
  %v253 = vpop.f32.mrb[0].mxu0
  %v254 = vadd.f32 0.0, %v253
  %v255 = vpop.f32.mrb[0].mxu0
  %v256 = vpop.f32.mrb[0].mxu0
  %v257 = vadd.f32 0.0, %v256
  %v258 = vpop.f32.mrb[0].mxu0
  %259 = vmatprep.mubr.bf16.mxu0 0
  %260 = vmatmul.mubr.bf16.gmra.mrb[0].mxu0 %v114
  %v261 = vpop.f32.mrb[0].mxu0
  %v262 = vadd.f32 0.0, %v261
  %v263 = vpop.f32.mrb[0].mxu0
  %v264 = vpop.f32.mrb[0].mxu0
  %v265 = vadd.f32 0.0, %v264
  %v266 = vpop.f32.mrb[0].mxu0
  %267 = vdwg.mxu0
  %269 = vset.pattern.permute.xlu0 0
  %270 = vperm.xlu0 %269, %v43
  %v271 = vpop.permute.xlu0 %270
  %274 = vset.pattern.permute.xlu0 0
  %275 = vperm.xlu0 %274, %v44
  %v276 = vpop.permute.xlu0 %275
  %279 = vset.pattern.permute.xlu0 0
  %280 = vperm.xlu0 %279, %v45
  %v281 = vpop.permute.xlu0 %280
  %284 = vset.pattern.permute.xlu0 0
  %285 = vperm.xlu0 %284, %v46
  %v286 = vpop.permute.xlu0 %285
  %289 = vset.pattern.permute.xlu0 0
  %290 = vperm.xlu0 %289, %v47
  %v291 = vpop.permute.xlu0 %290
  %294 = vset.pattern.permute.xlu0 0
  %295 = vperm.xlu0 %294, %v48
  %v296 = vpop.permute.xlu0 %295
  %299 = vset.pattern.permute.xlu0 0
  %300 = vperm.xlu0 %299, %v49
  %v301 = vpop.permute.xlu0 %300
  %304 = vset.pattern.permute.xlu0 0
  %305 = vperm.xlu0 %304, %v50
  %v306 = vpop.permute.xlu0 %305
  %309 = vset.pattern.permute.xlu0 0
  %310 = vperm.xlu0 %309, %v51
  %v311 = vpop.permute.xlu0 %310
  %314 = vset.pattern.permute.xlu0 0
  %315 = vperm.xlu0 %314, %v52
  %v316 = vpop.permute.xlu0 %315
  %319 = vset.pattern.permute.xlu0 0
  %320 = vperm.xlu0 %319, %v53
  %v321 = vpop.permute.xlu0 %320
  %324 = vset.pattern.permute.xlu0 0
  %325 = vperm.xlu0 %324, %v54
  %v326 = vpop.permute.xlu0 %325
  %329 = vset.pattern.permute.xlu0 0
  %330 = vperm.xlu0 %329, %v55
  %v331 = vpop.permute.xlu0 %330
  %334 = vset.pattern.permute.xlu0 0
  %335 = vperm.xlu0 %334, %v56
  %v336 = vpop.permute.xlu0 %335
  %339 = vset.pattern.permute.xlu0 0
  %340 = vperm.xlu0 %339, %v57
  %v341 = vpop.permute.xlu0 %340
  %344 = vset.pattern.permute.xlu0 0
  %345 = vperm.xlu0 %344, %v58
  %v346 = vpop.permute.xlu0 %345
  %v348 = vmul.f32 %v271, %v206
  %v349 = vmul.f32 %v276, %v209
  %v350 = vmul.f32 %v281, %v214
  %v351 = vmul.f32 %v286, %v217
  %v352 = vmul.f32 %v291, %v222
  %v353 = vmul.f32 %v296, %v225
  %v354 = vmul.f32 %v301, %v230
  %v355 = vmul.f32 %v306, %v233
  %v356 = vmul.f32 %v311, %v238
  %v357 = vmul.f32 %v316, %v241
  %v358 = vmul.f32 %v321, %v246
  %v359 = vmul.f32 %v326, %v249
  %v360 = vmul.f32 %v331, %v254
  %v361 = vmul.f32 %v336, %v257
  %v362 = vmul.f32 %v341, %v262
  %v363 = vmul.f32 %v346, %v265
  %v364 = vpack.c.bf16 %v349, %v348
  %v365 = vpack.c.bf16 %v351, %v350
  %v366 = vpack.c.bf16 %v353, %v352
  %v367 = vpack.c.bf16 %v355, %v354
  %v368 = vpack.c.bf16 %v357, %v356
  %v369 = vpack.c.bf16 %v359, %v358
  %v370 = vpack.c.bf16 %v361, %v360
  %v371 = vpack.c.bf16 %v363, %v362
  %v372 = vld [vmem:[%s3] sm:$0xf]
  %v373 = vld [vmem:[%s3 + $0x4] sm:$0xf]
  %v374 = vld [vmem:[%s3 + $0x8] sm:$0xf]
  %v375 = vld [vmem:[%s3 + $0xc] sm:$0xf]
  %v376 = vld [vmem:[%s3 + $0x10] sm:$0xf]
  %v377 = vld [vmem:[%s3 + $0x14] sm:$0xf]
  %v378 = vld [vmem:[%s3 + $0x18] sm:$0xf]
  %v379 = vld [vmem:[%s3 + $0x1c] sm:$0xf]
  %v380 = vld [vmem:[%s3 + $0x20] sm:$0xf]
  %v381 = vld [vmem:[%s3 + $0x24] sm:$0xf]
  %v382 = vld [vmem:[%s3 + $0x28] sm:$0xf]
  %v383 = vld [vmem:[%s3 + $0x2c] sm:$0xf]
  %v384 = vld [vmem:[%s3 + $0x30] sm:$0xf]
  %v385 = vld [vmem:[%s3 + $0x34] sm:$0xf]
  %v386 = vld [vmem:[%s3 + $0x38] sm:$0xf]
  %v387 = vld [vmem:[%s3 + $0x3c] sm:$0xf]
  %v388 = vld [vmem:[%s4] sm:$0x1]
  %v390 = vlaneseq
  %v391 = vshrl.u32 %v390, 7
  %v392 = vsub.s32 0, %v391
  %v393 = vrot.slane %v388, %v392
  %v411 = vunpack.c.l.b16 %v372
  %v412 = vunpack.c.l.b16 %v373
  %v413 = vunpack.c.l.b16 %v374
  %v414 = vunpack.c.l.b16 %v375
  %v415 = vunpack.c.l.b16 %v376
  %v416 = vunpack.c.l.b16 %v377
  %v417 = vunpack.c.l.b16 %v378
  %v418 = vunpack.c.l.b16 %v379
  %v419 = vunpack.c.l.b16 %v380
  %v420 = vunpack.c.l.b16 %v381
  %v421 = vunpack.c.l.b16 %v382
  %v422 = vunpack.c.l.b16 %v383
  %v423 = vunpack.c.l.b16 %v384
  %v424 = vunpack.c.l.b16 %v385
  %v425 = vunpack.c.l.b16 %v386
  %v426 = vunpack.c.l.b16 %v387
  %v427 = vpack.c.b16 %v412, %v411
  %v428 = vpack.c.b16 %v414, %v413
  %v429 = vpack.c.b16 %v416, %v415
  %v430 = vpack.c.b16 %v418, %v417
  %v431 = vpack.c.b16 %v420, %v419
  %v432 = vpack.c.b16 %v422, %v421
  %v433 = vpack.c.b16 %v424, %v423
  %v434 = vpack.c.b16 %v426, %v425
  %443 = vmatprep.subr.bf16.mxu0 0
  %444 = vmatpush1.bf16.msra.mxu0 %v427
  %445 = vmatprep.subr.bf16.mxu0 0
  %446 = vmatpush1.bf16.msra.mxu0 %v428
  %447 = vmatprep.subr.bf16.mxu0 0
  %448 = vmatpush1.bf16.msra.mxu0 %v429
  %449 = vmatprep.subr.bf16.mxu0 0
  %450 = vmatpush1.bf16.msra.mxu0 %v430
  %451 = vmatprep.subr.bf16.mxu0 0
  %452 = vmatpush1.bf16.msra.mxu0 %v431
  %453 = vmatprep.subr.bf16.mxu0 0
  %454 = vmatpush1.bf16.msra.mxu0 %v432
  %455 = vmatprep.subr.bf16.mxu0 0
  %456 = vmatpush1.bf16.msra.mxu0 %v433
  %457 = vmatprep.subr.bf16.mxu0 0
  %458 = vmatpush1.bf16.msra.mxu0 %v434
  %459 = vmatprep.subr.bf16.mxu0 0
  %460 = vmatpush1.bf16.msra.mxu0 0
  %461 = vmatprep.subr.bf16.mxu0 0
  %462 = vmatpush1.bf16.msra.mxu0 0
  %463 = vmatprep.subr.bf16.mxu0 0
  %464 = vmatpush1.bf16.msra.mxu0 0
  %465 = vmatprep.subr.bf16.mxu0 0
  %466 = vmatpush1.bf16.msra.mxu0 0
  %467 = vmatprep.subr.bf16.mxu0 0
  %468 = vmatpush1.bf16.msra.mxu0 0
  %469 = vmatprep.subr.bf16.mxu0 0
  %470 = vmatpush1.bf16.msra.mxu0 0
  %471 = vmatprep.subr.bf16.mxu0 0
  %472 = vmatpush1.bf16.msra.mxu0 0
  %473 = vmatprep.subr.bf16.mxu0 0
  %474 = vmatpush1.bf16.msra.mxu0 0
  %475 = vmatprep.mubr.bf16.mxu0 0
  %476 = vmatmul.mubr.bf16.gmra.mrb[0].mxu0 %v364
  %v477 = vpop.f32.mrb[0].mxu0
  %v478 = vadd.f32 %v393, %v477
  %v479 = vpop.f32.mrb[0].mxu0
  %v480 = vpop.f32.mrb[0].mxu0
  %v481 = vadd.f32 %v393, %v480
  %v482 = vpop.f32.mrb[0].mxu0
  %483 = vmatprep.mubr.bf16.mxu0 0
  %484 = vmatmul.mubr.bf16.gmra.mrb[0].mxu0 %v365
  %v485 = vpop.f32.mrb[0].mxu0
  %v486 = vadd.f32 %v393, %v485
  %v487 = vpop.f32.mrb[0].mxu0
  %v488 = vpop.f32.mrb[0].mxu0
  %v489 = vadd.f32 %v393, %v488
  %v490 = vpop.f32.mrb[0].mxu0
  %491 = vmatprep.mubr.bf16.mxu0 0
  %492 = vmatmul.mubr.bf16.gmra.mrb[0].mxu0 %v366
  %v493 = vpop.f32.mrb[0].mxu0
  %v494 = vadd.f32 %v393, %v493
  %v495 = vpop.f32.mrb[0].mxu0
  %v496 = vpop.f32.mrb[0].mxu0
  %v497 = vadd.f32 %v393, %v496
  %v498 = vpop.f32.mrb[0].mxu0
  %499 = vmatprep.mubr.bf16.mxu0 0
  %500 = vmatmul.mubr.bf16.gmra.mrb[0].mxu0 %v367
  %v501 = vpop.f32.mrb[0].mxu0
  %v502 = vadd.f32 %v393, %v501
  %v503 = vpop.f32.mrb[0].mxu0
  %v504 = vpop.f32.mrb[0].mxu0
  %v505 = vadd.f32 %v393, %v504
  %v506 = vpop.f32.mrb[0].mxu0
  %507 = vmatprep.mubr.bf16.mxu0 0
  %508 = vmatmul.mubr.bf16.gmra.mrb[0].mxu0 %v368
  %v509 = vpop.f32.mrb[0].mxu0
  %v510 = vadd.f32 %v393, %v509
  %v511 = vpop.f32.mrb[0].mxu0
  %v512 = vpop.f32.mrb[0].mxu0
  %v513 = vadd.f32 %v393, %v512
  %v514 = vpop.f32.mrb[0].mxu0
  %515 = vmatprep.mubr.bf16.mxu0 0
  %516 = vmatmul.mubr.bf16.gmra.mrb[0].mxu0 %v369
  %v517 = vpop.f32.mrb[0].mxu0
  %v518 = vadd.f32 %v393, %v517
  %v519 = vpop.f32.mrb[0].mxu0
  %v520 = vpop.f32.mrb[0].mxu0
  %v521 = vadd.f32 %v393, %v520
  %v522 = vpop.f32.mrb[0].mxu0
  %523 = vmatprep.mubr.bf16.mxu0 0
  %524 = vmatmul.mubr.bf16.gmra.mrb[0].mxu0 %v370
  %v525 = vpop.f32.mrb[0].mxu0
  %v526 = vadd.f32 %v393, %v525
  %v527 = vpop.f32.mrb[0].mxu0
  %v528 = vpop.f32.mrb[0].mxu0
  %v529 = vadd.f32 %v393, %v528
  %v530 = vpop.f32.mrb[0].mxu0
  %531 = vmatprep.mubr.bf16.mxu0 0
  %532 = vmatmul.mubr.bf16.gmra.mrb[0].mxu0 %v371
  %v533 = vpop.f32.mrb[0].mxu0
  %v534 = vadd.f32 %v393, %v533
  %v535 = vpop.f32.mrb[0].mxu0
  %v536 = vpop.f32.mrb[0].mxu0
  %v537 = vadd.f32 %v393, %v536
  %v538 = vpop.f32.mrb[0].mxu0
  %539 = vdwg.mxu0
  %v540 = vmax.f32 %v478, 0.0
  %v541 = vmax.f32 %v481, 0.0
  %v542 = vmax.f32 %v486, 0.0
  %v543 = vmax.f32 %v489, 0.0
  %v544 = vmax.f32 %v494, 0.0
  %v545 = vmax.f32 %v497, 0.0
  %v546 = vmax.f32 %v502, 0.0
  %v547 = vmax.f32 %v505, 0.0
  %v548 = vmax.f32 %v510, 0.0
  %v549 = vmax.f32 %v513, 0.0
  %v550 = vmax.f32 %v518, 0.0
  %v551 = vmax.f32 %v521, 0.0
  %v552 = vmax.f32 %v526, 0.0
  %v553 = vmax.f32 %v529, 0.0
  %v554 = vmax.f32 %v534, 0.0
  %v555 = vmax.f32 %v537, 0.0
  %v556 = vmul.f32 %v540, %v271
  %v557 = vmul.f32 %v541, %v276
  %v558 = vmul.f32 %v542, %v281
  %v559 = vmul.f32 %v543, %v286
  %v560 = vmul.f32 %v544, %v291
  %v561 = vmul.f32 %v545, %v296
  %v562 = vmul.f32 %v546, %v301
  %v563 = vmul.f32 %v547, %v306
  %v564 = vmul.f32 %v548, %v311
  %v565 = vmul.f32 %v549, %v316
  %v566 = vmul.f32 %v550, %v321
  %v567 = vmul.f32 %v551, %v326
  %v568 = vmul.f32 %v552, %v331
  %v569 = vmul.f32 %v553, %v336
  %v570 = vmul.f32 %v554, %v341
  %v571 = vmul.f32 %v555, %v346
  %v572 = vpack.c.bf16 %v557, %v556
  %v573 = vpack.c.bf16 %v559, %v558
  %v574 = vpack.c.bf16 %v561, %v560
  %v575 = vpack.c.bf16 %v563, %v562
  %v576 = vpack.c.bf16 %v565, %v564
  %v577 = vpack.c.bf16 %v567, %v566
  %v578 = vpack.c.bf16 %v569, %v568
  %v579 = vpack.c.bf16 %v571, %v570
  %580 = vmatprep.subr.bf16.mxu0 0
  %581 = vmatpush1.bf16.msra.mxu0 %v572
  %582 = vmatprep.subr.bf16.mxu0 0
  %583 = vmatpush1.bf16.msra.mxu0 %v573
  %584 = vmatprep.subr.bf16.mxu0 0
  %585 = vmatpush1.bf16.msra.mxu0 %v574
  %586 = vmatprep.subr.bf16.mxu0 0
  %587 = vmatpush1.bf16.msra.mxu0 %v575
  %588 = vmatprep.subr.bf16.mxu0 0
  %589 = vmatpush1.bf16.msra.mxu0 %v576
  %590 = vmatprep.subr.bf16.mxu0 0
  %591 = vmatpush1.bf16.msra.mxu0 %v577
  %592 = vmatprep.subr.bf16.mxu0 0
  %593 = vmatpush1.bf16.msra.mxu0 %v578
  %594 = vmatprep.subr.bf16.mxu0 0
  %595 = vmatpush1.bf16.msra.mxu0 %v579
  %596 = vmatprep.subr.bf16.mxu0 0
  %597 = vmatpush1.bf16.msra.mxu0 0
  %598 = vmatprep.subr.bf16.mxu0 0
  %599 = vmatpush1.bf16.msra.mxu0 0
  %600 = vmatprep.subr.bf16.mxu0 0
  %601 = vmatpush1.bf16.msra.mxu0 0
  %602 = vmatprep.subr.bf16.mxu0 0
  %603 = vmatpush1.bf16.msra.mxu0 0
  %604 = vmatprep.subr.bf16.mxu0 0
  %605 = vmatpush1.bf16.msra.mxu0 0
  %606 = vmatprep.subr.bf16.mxu0 0
  %607 = vmatpush1.bf16.msra.mxu0 0
  %608 = vmatprep.subr.bf16.mxu0 0
  %609 = vmatpush1.bf16.msra.mxu0 0
  %610 = vmatprep.subr.bf16.mxu0 0
  %611 = vmatpush1.bf16.msra.mxu0 0
  %612 = vmatprep.mubr.bf16.mxu0 0
  %613 = vmatmul.mubr.bf16.gmra.mrb[0].mxu0 %v107
  %v614 = vpop.f32.mrb[0].mxu0
  %v615 = vadd.f32 0.0, %v614
  %v616 = vpop.f32.mrb[0].mxu0
  %v617 = vpop.f32.mrb[0].mxu0
  %v618 = vadd.f32 0.0, %v617
  %v619 = vpop.f32.mrb[0].mxu0
  %620 = vmatprep.mubr.bf16.mxu0 0
  %621 = vmatmul.mubr.bf16.gmra.mrb[0].mxu0 %v108
  %v622 = vpop.f32.mrb[0].mxu0
  %v623 = vadd.f32 0.0, %v622
  %v624 = vpop.f32.mrb[0].mxu0
  %v625 = vpop.f32.mrb[0].mxu0
  %v626 = vadd.f32 0.0, %v625
  %v627 = vpop.f32.mrb[0].mxu0
  %628 = vmatprep.mubr.bf16.mxu0 0
  %629 = vmatmul.mubr.bf16.gmra.mrb[0].mxu0 %v109
  %v630 = vpop.f32.mrb[0].mxu0
  %v631 = vadd.f32 0.0, %v630
  %v632 = vpop.f32.mrb[0].mxu0
  %v633 = vpop.f32.mrb[0].mxu0
  %v634 = vadd.f32 0.0, %v633
  %v635 = vpop.f32.mrb[0].mxu0
  %636 = vmatprep.mubr.bf16.mxu0 0
  %637 = vmatmul.mubr.bf16.gmra.mrb[0].mxu0 %v110
  %v638 = vpop.f32.mrb[0].mxu0
  %v639 = vadd.f32 0.0, %v638
  %v640 = vpop.f32.mrb[0].mxu0
  %v641 = vpop.f32.mrb[0].mxu0
  %v642 = vadd.f32 0.0, %v641
  %v643 = vpop.f32.mrb[0].mxu0
  %644 = vmatprep.mubr.bf16.mxu0 0
  %645 = vmatmul.mubr.bf16.gmra.mrb[0].mxu0 %v111
  %v646 = vpop.f32.mrb[0].mxu0
  %v647 = vadd.f32 0.0, %v646
  %v648 = vpop.f32.mrb[0].mxu0
  %v649 = vpop.f32.mrb[0].mxu0
  %v650 = vadd.f32 0.0, %v649
  %v651 = vpop.f32.mrb[0].mxu0
  %652 = vmatprep.mubr.bf16.mxu0 0
  %653 = vmatmul.mubr.bf16.gmra.mrb[0].mxu0 %v112
  %v654 = vpop.f32.mrb[0].mxu0
  %v655 = vadd.f32 0.0, %v654
  %v656 = vpop.f32.mrb[0].mxu0
  %v657 = vpop.f32.mrb[0].mxu0
  %v658 = vadd.f32 0.0, %v657
  %v659 = vpop.f32.mrb[0].mxu0
  %660 = vmatprep.mubr.bf16.mxu0 0
  %661 = vmatmul.mubr.bf16.gmra.mrb[0].mxu0 %v113
  %v662 = vpop.f32.mrb[0].mxu0
  %v663 = vadd.f32 0.0, %v662
  %v664 = vpop.f32.mrb[0].mxu0
  %v665 = vpop.f32.mrb[0].mxu0
  %v666 = vadd.f32 0.0, %v665
  %v667 = vpop.f32.mrb[0].mxu0
  %668 = vmatprep.mubr.bf16.mxu0 0
  %669 = vmatmul.mubr.bf16.gmra.mrb[0].mxu0 %v114
  %v670 = vpop.f32.mrb[0].mxu0
  %v671 = vadd.f32 0.0, %v670
  %v672 = vpop.f32.mrb[0].mxu0
  %v673 = vpop.f32.mrb[0].mxu0
  %v674 = vadd.f32 0.0, %v673
  %v675 = vpop.f32.mrb[0].mxu0
  %676 = vdwg.mxu0
  %v677 = vmul.f32 %v271, %v615
  %v678 = vmul.f32 %v276, %v618
  %v679 = vmul.f32 %v281, %v623
  %v680 = vmul.f32 %v286, %v626
  %v681 = vmul.f32 %v291, %v631
  %v682 = vmul.f32 %v296, %v634
  %v683 = vmul.f32 %v301, %v639
  %v684 = vmul.f32 %v306, %v642
  %v685 = vmul.f32 %v311, %v647
  %v686 = vmul.f32 %v316, %v650
  %v687 = vmul.f32 %v321, %v655
  %v688 = vmul.f32 %v326, %v658
  %v689 = vmul.f32 %v331, %v663
  %v690 = vmul.f32 %v336, %v666
  %v691 = vmul.f32 %v341, %v671
  %v692 = vmul.f32 %v346, %v674
  %v693 = vpack.c.bf16 %v678, %v677
  %v694 = vpack.c.bf16 %v680, %v679
  %v695 = vpack.c.bf16 %v682, %v681
  %v696 = vpack.c.bf16 %v684, %v683
  %v697 = vpack.c.bf16 %v686, %v685
  %v698 = vpack.c.bf16 %v688, %v687
  %v699 = vpack.c.bf16 %v690, %v689
  %v700 = vpack.c.bf16 %v692, %v691
  %v701 = vld [vmem:[%s5] sm:$0xf]
  %v702 = vld [vmem:[%s5 + $0x4] sm:$0xf]
  %v703 = vld [vmem:[%s5 + $0x8] sm:$0xf]
  %v704 = vld [vmem:[%s5 + $0xc] sm:$0xf]
  %v705 = vld [vmem:[%s5 + $0x10] sm:$0xf]
  %v706 = vld [vmem:[%s5 + $0x14] sm:$0xf]
  %v707 = vld [vmem:[%s5 + $0x18] sm:$0xf]
  %v708 = vld [vmem:[%s5 + $0x1c] sm:$0xf]
  %v709 = vld [vmem:[%s5 + $0x20] sm:$0xf]
  %v710 = vld [vmem:[%s5 + $0x24] sm:$0xf]
  %v711 = vld [vmem:[%s5 + $0x28] sm:$0xf]
  %v712 = vld [vmem:[%s5 + $0x2c] sm:$0xf]
  %v713 = vld [vmem:[%s5 + $0x30] sm:$0xf]
  %v714 = vld [vmem:[%s5 + $0x34] sm:$0xf]
  %v715 = vld [vmem:[%s5 + $0x38] sm:$0xf]
  %v716 = vld [vmem:[%s5 + $0x3c] sm:$0xf]
  %v717 = vld [vmem:[%s6] sm:$0x1]
  %v719 = vlaneseq
  %v720 = vshrl.u32 %v719, 7
  %v721 = vsub.s32 0, %v720
  %v722 = vrot.slane %v717, %v721
  %v740 = vunpack.c.l.b16 %v701
  %v741 = vunpack.c.l.b16 %v702
  %v742 = vunpack.c.l.b16 %v703
  %v743 = vunpack.c.l.b16 %v704
  %v744 = vunpack.c.l.b16 %v705
  %v745 = vunpack.c.l.b16 %v706
  %v746 = vunpack.c.l.b16 %v707
  %v747 = vunpack.c.l.b16 %v708
  %v748 = vunpack.c.l.b16 %v709
  %v749 = vunpack.c.l.b16 %v710
  %v750 = vunpack.c.l.b16 %v711
  %v751 = vunpack.c.l.b16 %v712
  %v752 = vunpack.c.l.b16 %v713
  %v753 = vunpack.c.l.b16 %v714
  %v754 = vunpack.c.l.b16 %v715
  %v755 = vunpack.c.l.b16 %v716
  %v756 = vpack.c.b16 %v741, %v740
  %v757 = vpack.c.b16 %v743, %v742
  %v758 = vpack.c.b16 %v745, %v744
  %v759 = vpack.c.b16 %v747, %v746
  %v760 = vpack.c.b16 %v749, %v748
  %v761 = vpack.c.b16 %v751, %v750
  %v762 = vpack.c.b16 %v753, %v752
  %v763 = vpack.c.b16 %v755, %v754
  %772 = vmatprep.subr.bf16.mxu0 0
  %773 = vmatpush1.bf16.msra.mxu0 %v756
  %774 = vmatprep.subr.bf16.mxu0 0
  %775 = vmatpush1.bf16.msra.mxu0 %v757
  %776 = vmatprep.subr.bf16.mxu0 0
  %777 = vmatpush1.bf16.msra.mxu0 %v758
  %778 = vmatprep.subr.bf16.mxu0 0
  %779 = vmatpush1.bf16.msra.mxu0 %v759
  %780 = vmatprep.subr.bf16.mxu0 0
  %781 = vmatpush1.bf16.msra.mxu0 %v760
  %782 = vmatprep.subr.bf16.mxu0 0
  %783 = vmatpush1.bf16.msra.mxu0 %v761
  %784 = vmatprep.subr.bf16.mxu0 0
  %785 = vmatpush1.bf16.msra.mxu0 %v762
  %786 = vmatprep.subr.bf16.mxu0 0
  %787 = vmatpush1.bf16.msra.mxu0 %v763
  %788 = vmatprep.subr.bf16.mxu0 0
  %789 = vmatpush1.bf16.msra.mxu0 0
  %790 = vmatprep.subr.bf16.mxu0 0
  %791 = vmatpush1.bf16.msra.mxu0 0
  %792 = vmatprep.subr.bf16.mxu0 0
  %793 = vmatpush1.bf16.msra.mxu0 0
  %794 = vmatprep.subr.bf16.mxu0 0
  %795 = vmatpush1.bf16.msra.mxu0 0
  %796 = vmatprep.subr.bf16.mxu0 0
  %797 = vmatpush1.bf16.msra.mxu0 0
  %798 = vmatprep.subr.bf16.mxu0 0
  %799 = vmatpush1.bf16.msra.mxu0 0
  %800 = vmatprep.subr.bf16.mxu0 0
  %801 = vmatpush1.bf16.msra.mxu0 0
  %802 = vmatprep.subr.bf16.mxu0 0
  %803 = vmatpush1.bf16.msra.mxu0 0
  %804 = vmatprep.mubr.bf16.mxu0 0
  %805 = vmatmul.mubr.bf16.gmra.mrb[0].mxu0 %v693
  %v806 = vpop.f32.mrb[0].mxu0
  %v807 = vadd.f32 %v722, %v806
  %v808 = vpop.f32.mrb[0].mxu0
  %v809 = vpop.f32.mrb[0].mxu0
  %v810 = vadd.f32 %v722, %v809
  %v811 = vpop.f32.mrb[0].mxu0
  %812 = vmatprep.mubr.bf16.mxu0 0
  %813 = vmatmul.mubr.bf16.gmra.mrb[0].mxu0 %v694
  %v814 = vpop.f32.mrb[0].mxu0
  %v815 = vadd.f32 %v722, %v814
  %v816 = vpop.f32.mrb[0].mxu0
  %v817 = vpop.f32.mrb[0].mxu0
  %v818 = vadd.f32 %v722, %v817
  %v819 = vpop.f32.mrb[0].mxu0
  %820 = vmatprep.mubr.bf16.mxu0 0
  %821 = vmatmul.mubr.bf16.gmra.mrb[0].mxu0 %v695
  %v822 = vpop.f32.mrb[0].mxu0
  %v823 = vadd.f32 %v722, %v822
  %v824 = vpop.f32.mrb[0].mxu0
  %v825 = vpop.f32.mrb[0].mxu0
  %v826 = vadd.f32 %v722, %v825
  %v827 = vpop.f32.mrb[0].mxu0
  %828 = vmatprep.mubr.bf16.mxu0 0
  %829 = vmatmul.mubr.bf16.gmra.mrb[0].mxu0 %v696
  %v830 = vpop.f32.mrb[0].mxu0
  %v831 = vadd.f32 %v722, %v830
  %v832 = vpop.f32.mrb[0].mxu0
  %v833 = vpop.f32.mrb[0].mxu0
  %v834 = vadd.f32 %v722, %v833
  %v835 = vpop.f32.mrb[0].mxu0
  %836 = vmatprep.mubr.bf16.mxu0 0
  %837 = vmatmul.mubr.bf16.gmra.mrb[0].mxu0 %v697
  %v838 = vpop.f32.mrb[0].mxu0
  %v839 = vadd.f32 %v722, %v838
  %v840 = vpop.f32.mrb[0].mxu0
  %v841 = vpop.f32.mrb[0].mxu0
  %v842 = vadd.f32 %v722, %v841
  %v843 = vpop.f32.mrb[0].mxu0
  %844 = vmatprep.mubr.bf16.mxu0 0
  %845 = vmatmul.mubr.bf16.gmra.mrb[0].mxu0 %v698
  %v846 = vpop.f32.mrb[0].mxu0
  %v847 = vadd.f32 %v722, %v846
  %v848 = vpop.f32.mrb[0].mxu0
  %v849 = vpop.f32.mrb[0].mxu0
  %v850 = vadd.f32 %v722, %v849
  %v851 = vpop.f32.mrb[0].mxu0
  %852 = vmatprep.mubr.bf16.mxu0 0
  %853 = vmatmul.mubr.bf16.gmra.mrb[0].mxu0 %v699
  %v854 = vpop.f32.mrb[0].mxu0
  %v855 = vadd.f32 %v722, %v854
  %v856 = vpop.f32.mrb[0].mxu0
  %v857 = vpop.f32.mrb[0].mxu0
  %v858 = vadd.f32 %v722, %v857
  %v859 = vpop.f32.mrb[0].mxu0
  %860 = vmatprep.mubr.bf16.mxu0 0
  %861 = vmatmul.mubr.bf16.gmra.mrb[0].mxu0 %v700
  %v862 = vpop.f32.mrb[0].mxu0
  %v863 = vadd.f32 %v722, %v862
  %v864 = vpop.f32.mrb[0].mxu0
  %v865 = vpop.f32.mrb[0].mxu0
  %v866 = vadd.f32 %v722, %v865
  %v867 = vpop.f32.mrb[0].mxu0
  %868 = vdwg.mxu0
  %869 = vst [vmem:[%s7] sm:$0xff] %v807
  %870 = vst [vmem:[%s7 + $0x8] sm:$0xff] %v810
  %871 = vst [vmem:[%s7 + $0x10] sm:$0xff] %v815
  %872 = vst [vmem:[%s7 + $0x18] sm:$0xff] %v818
  %873 = vst [vmem:[%s7 + $0x20] sm:$0xff] %v823
  %874 = vst [vmem:[%s7 + $0x28] sm:$0xff] %v826
  %875 = vst [vmem:[%s7 + $0x30] sm:$0xff] %v831
  %876 = vst [vmem:[%s7 + $0x38] sm:$0xff] %v834
  %877 = vst [vmem:[%s7 + $0x40] sm:$0xff] %v839
  %878 = vst [vmem:[%s7 + $0x48] sm:$0xff] %v842
  %879 = vst [vmem:[%s7 + $0x50] sm:$0xff] %v847
  %880 = vst [vmem:[%s7 + $0x58] sm:$0xff] %v850
  %881 = vst [vmem:[%s7 + $0x60] sm:$0xff] %v855
  %882 = vst [vmem:[%s7 + $0x68] sm:$0xff] %v858
  %883 = vst [vmem:[%s7 + $0x70] sm:$0xff] %v863
  %884 = vst [vmem:[%s7 + $0x78] sm:$0xff] %v866
  // Predicated region
  $region30: #{attribute_decoder_forward.1} parent=0 // pred_check
    _
  $region31: #{attribute_decoder_forward.1} parent=0 // pred_check_branch
    %886 = sbr.rel (0) target = $region33
  $region32: #{attribute_decoder_forward.1} parent=0 // pred_region
    _
  $region33: #{attribute_decoder_forward.1} parent=0 // pred_fallthru
    _
  // Predicated region
  $region34: #{attribute_decoder_forward.1} parent=0 // pred_check
    _
  $region35: #{attribute_decoder_forward.1} parent=0 // pred_check_branch
    %888 = sbr.rel (0) target = $region37
  $region36: #{attribute_decoder_forward.1} parent=0 // pred_region
    _
  $region37: #{attribute_decoder_forward.1} parent=0 // pred_fallthru
    _

</llo_original>
